<compile_context>
chip_gen: v5e
topology: v5e:2x2
jax: 0.10.0
libtpu: 0.0.40
codegen_flags: <defaults>
</compile_context>

<pallas_src>
import math
import numpy as np
import jax
import jax.numpy as jnp
from jax.experimental import pallas as pl
from jax.experimental.pallas import tpu as pltpu


# ----------------------------------------------------------------------------
# Glue: build the per-cutout 1-D resampling matrices (numpy, data independent).
# ----------------------------------------------------------------------------
def _sinc(x):
    return np.where(x != 0, np.sin(np.pi * x) / (np.pi * x), 1.0)


def _lanczos(x, a):
    cond = np.logical_and(-a < x, x < a)
    out = np.where(cond, _sinc(x) * _sinc(x / a), 0.0)
    return out / out.sum()


def _ramp(ratio, width):
    n = math.ceil(width / ratio + 1)
    out = np.arange(n, dtype=np.float64) * ratio
    full = np.concatenate([-out[1:][::-1], out])
    return full[1:-1]


def _reflect(i, n):
    # torch F.pad(mode='reflect') index map (pad < n always holds here)
    if i < 0:
        return -i
    if i >= n:
        return 2 * (n - 1) - i
    return i


def _lanczos_conv_matrix(s, d):
    """(s, s): reflect-pad + 1-D Lanczos conv (used only when d < s)."""
    k = _lanczos(_ramp(d / s, 2), 2).astype(np.float64)
    K = k.shape[0]
    pad = (K - 1) // 2
    L = np.zeros((s, s), dtype=np.float64)
    for i in range(s):
        for t in range(K):
            L[i, _reflect(i + t - pad, s)] += k[t]
    return L


def _cubic_w(t, A=-0.75):
    def c1(x):
        return ((A + 2.0) * x - (A + 3.0)) * x * x + 1.0

    def c2(x):
        return ((A * x - 5.0 * A) * x + 8.0 * A) * x - 4.0 * A

    return np.array([c2(t + 1.0), c1(t), c1(1.0 - t), c2(2.0 - t)])


def _bicubic_matrix(s, d):
    """(d, s): torch F.interpolate(mode='bicubic', align_corners=True)."""
    B = np.zeros((d, s), dtype=np.float64)
    for i in range(d):
        x = 0.0 if d == 1 else i * (s - 1) / (d - 1)
        i0 = int(np.floor(x))
        t = x - i0
        w = _cubic_w(t)
        for m in range(4):
            j = min(max(i0 - 1 + m, 0), s - 1)
            B[i, j] += w[m]
    return B


def _resample_matrix(s, d):
    """1-D linear operator of resample(): (d, s)."""
    B = _bicubic_matrix(s, d)
    if d < s:
        return B @ _lanczos_conv_matrix(s, d)
    return B


# ----------------------------------------------------------------------------
# Pallas kernel: per cutout, 2*C MXU matmuls (bf16 in, f32 accumulate) + fused
# noise add.  Image block has a constant index map -> fetched into VMEM once.
# ----------------------------------------------------------------------------
def make_cutouts_pallas(img_chw_bf16, Wy_bf16, WxT_bf16, noise, facs):
    C, H, W = img_chw_bf16.shape
    cutn, cs, _ = Wy_bf16.shape

    def kernel(fac_ref, wy_ref, img_ref, wxT_ref, noise_ref, out_ref):
        i = pl.program_id(0)
        fac = fac_ref[i]                       # scalar from SMEM
        wy = wy_ref[0]                         # (cs, H)  bf16
        wxT = wxT_ref[0]                       # (W, cs)  bf16
        for c in range(C):                     # static unroll, C is small (3)
            tmp = jnp.dot(wy, img_ref[c],
                          preferred_element_type=jnp.float32)      # (cs, W) f32
            res = jnp.dot(tmp.astype(jnp.bfloat16), wxT,
                          preferred_element_type=jnp.float32)      # (cs, cs) f32
            out_ref[0, c] = res + fac * noise_ref[0, c]

    # VMEM budget (double-buffered per-cutout tiles + resident image), clamped
    # to 64 MiB so the same setting is valid on v7x.
    bf16b, f32b = 2, 4
    vmem_need = (
        2 * C * H * W * bf16b                       # image block
        + 2 * (cs * H + W * cs) * bf16b             # Wy + WxT tiles
        + 2 * C * cs * cs * f32b                    # noise tile
        + 2 * C * cs * cs * f32b                    # out tile
    )
    vmem_limit = int(min(64 << 20, max(32 << 20, vmem_need + (4 << 20))))

    grid_spec = pltpu.PrefetchScalarGridSpec(
        num_scalar_prefetch=1,                      # facs -> SMEM
        grid=(cutn,),
        in_specs=[
            pl.BlockSpec((1, cs, H), lambda i, facs: (i, 0, 0)),        # Wy
            pl.BlockSpec((C, H, W), lambda i, facs: (0, 0, 0)),         # img (constant index)
            pl.BlockSpec((1, W, cs), lambda i, facs: (i, 0, 0)),        # WxT (pre-transposed)
            pl.BlockSpec((1, C, cs, cs), lambda i, facs: (i, 0, 0, 0)),  # noise
        ],
        out_specs=pl.BlockSpec((1, C, cs, cs), lambda i, facs: (i, 0, 0, 0)),
    )
    return pl.pallas_call(
        kernel,
        out_shape=jax.ShapeDtypeStruct((cutn, C, cs, cs), jnp.float32),
        grid_spec=grid_spec,
        compiler_params=pltpu.CompilerParams(
            dimension_semantics=("parallel",),
            vmem_limit_bytes=vmem_limit),
    )(facs, Wy_bf16, img_chw_bf16, WxT_bf16, noise)


# ----------------------------------------------------------------------------
# MakeCutouts forward (batch=1, channel=3 as in the original usage).
# ----------------------------------------------------------------------------
def make_cutouts_forward(input_nchw, cut_size, cutn, cut_pow=1.0,
                         noise_fac=0.1, key=None):
    assert input_nchw.shape[0] == 1, "reference module is used with batch=1"
    _, C, sideY, sideX = input_nchw.shape
    img_bf16 = input_nchw[0].astype(jnp.bfloat16)        # (C, H, W)

    max_size = min(sideX, sideY)
    min_size = min(sideX, sideY, cut_size)

    k_cut, k_fac, k_noise = jax.random.split(key, 3)

    # One batched host sync for all cutout geometry randoms.
    u = np.asarray(jax.random.uniform(k_cut, (cutn, 3), jnp.float32))

    Wy = np.zeros((cutn, cut_size, sideY), dtype=np.float32)
    Wx = np.zeros((cutn, cut_size, sideX), dtype=np.float32)
    for i in range(cutn):
        r, uy, ux = float(u[i, 0]), float(u[i, 1]), float(u[i, 2])
        size = int(r ** cut_pow * (max_size - min_size) + min_size)
        offsety = int(uy * (sideY - size + 1))
        offsetx = int(ux * (sideX - size + 1))
        R = _resample_matrix(size, cut_size).astype(np.float32)   # (cs, size)
        Wy[i, :, offsety:offsety + size] = R
        Wx[i, :, offsetx:offsetx + size] = R

    Wy_bf16 = jnp.asarray(Wy, dtype=jnp.bfloat16)                          # (cutn, cs, H)
    WxT_bf16 = jnp.asarray(np.transpose(Wx, (0, 2, 1)), dtype=jnp.bfloat16)  # (cutn, W, cs)

    facs = jax.random.uniform(k_fac, (cutn,), jnp.float32, 0.0, noise_fac)
    noise = jax.random.normal(k_noise, (cutn, C, cut_size, cut_size), jnp.float32)

    out = make_cutouts_pallas(img_bf16, Wy_bf16, WxT_bf16, noise, facs)

    # pure-JAX reference mirroring the kernel's bf16-in / f32-accumulate path
    Wy_f = Wy_bf16.astype(jnp.float32)
    img_f = img_bf16.astype(jnp.float32)
    WxT_f = WxT_bf16.astype(jnp.float32)
    tmp = jnp.einsum("iyh,chw->icyw", Wy_f, img_f)
    tmp = tmp.astype(jnp.bfloat16).astype(jnp.float32)
    ref = jnp.einsum("icyw,iwx->icyx", tmp, WxT_f) \
        + facs[:, None, None, None] * noise
    return out, ref


if __name__ == "__main__":
    key = jax.random.PRNGKey(0)
    k_img, k_fwd = jax.random.split(key)

    # small shapes consistent with the module: NCHW, batch=1, 3 channels
    x = jax.random.normal(k_img, (1, 3, 16, 16), jnp.float32)
    cut_size, cutn, cut_pow = 8, 5, 1.0

    out, ref = make_cutouts_forward(x, cut_size, cutn, cut_pow,
                                    noise_fac=0.1, key=k_fwd)
    out = jax.block_until_ready(out)

    assert out.shape == (cutn, 3, cut_size, cut_size)
    assert out.dtype == jnp.float32
    np.testing.assert_allclose(np.asarray(out), np.asarray(ref),
                               rtol=1e-2, atol=1e-2)
    print("KERNEL_OK")
</pallas_src>

<mosaic_0001>
module attributes {stable_mosaic.version = 11 : i64} {
  func.func @kernel(%arg0: i32, %arg1: memref<5xf32, #tpu.memory_space<smem>>, %arg2: memref<1x8x16xbf16, #tpu.memory_space<vmem>>, %arg3: memref<3x16x16xbf16, #tpu.memory_space<vmem>>, %arg4: memref<1x16x8xbf16, #tpu.memory_space<vmem>>, %arg5: memref<1x3x8x8xf32, #tpu.memory_space<vmem>>, %arg6: memref<1x3x8x8xf32, #tpu.memory_space<vmem>>) attributes {dimension_semantics = [#tpu.dimension_semantics<parallel>], iteration_bounds = array<i64: 5>, scalar_prefetch = 1 : i64, scratch_operands = 0 : i64, tpu.core_type = #tpu.core_type<tc>, window_params = [{transform_indices = @transform_0, window_bounds = array<i64: 1, 8, 16>}, {pipeline_mode = #tpu.pipeline_mode<synchronous>, transform_indices = @transform_1, window_bounds = array<i64: 3, 16, 16>}, {transform_indices = @transform_2, window_bounds = array<i64: 1, 16, 8>}, {transform_indices = @transform_3, window_bounds = array<i64: 1, 3, 8, 8>}, {transform_indices = @transform_4, window_bounds = array<i64: 1, 3, 8, 8>}]} {
    %0 = arith.index_cast %arg0 : i32 to index
    %1 = memref.load %arg1[%0] : memref<5xf32, #tpu.memory_space<smem>>
    %c0 = arith.constant 0 : index
    %c0_0 = arith.constant 0 : index
    %c0_1 = arith.constant 0 : index
    %2 = vector.load %arg2[%c0, %c0_0, %c0_1] : memref<1x8x16xbf16, #tpu.memory_space<vmem>>, vector<1x8x16xbf16>
    %3 = vector.shape_cast %2 : vector<1x8x16xbf16> to vector<8x16xbf16>
    %c0_2 = arith.constant 0 : index
    %c0_3 = arith.constant 0 : index
    %c0_4 = arith.constant 0 : index
    %4 = vector.load %arg4[%c0_2, %c0_3, %c0_4] : memref<1x16x8xbf16, #tpu.memory_space<vmem>>, vector<1x16x8xbf16>
    %5 = vector.shape_cast %4 : vector<1x16x8xbf16> to vector<16x8xbf16>
    %c0_5 = arith.constant 0 : index
    %c0_6 = arith.constant 0 : index
    %c0_7 = arith.constant 0 : index
    %6 = vector.load %arg3[%c0_5, %c0_6, %c0_7] : memref<3x16x16xbf16, #tpu.memory_space<vmem>>, vector<1x16x16xbf16>
    %7 = vector.shape_cast %6 : vector<1x16x16xbf16> to vector<16x16xbf16>
    %cst = arith.constant dense<0.000000e+00> : vector<8x16xf32>
    %8 = tpu.matmul %3, %7, %cst {dimension_numbers = #tpu.dot_dimension_numbers<[1], [0], [0], [1], [0, 0, 1, 1], [], []>} : vector<8x16xbf16>, vector<16x16xbf16>, vector<8x16xf32> -> vector<8x16xf32>
    %9 = arith.truncf %8 : vector<8x16xf32> to vector<8x16xbf16>
    %cst_8 = arith.constant dense<0.000000e+00> : vector<8x8xf32>
    %10 = tpu.matmul %9, %5, %cst_8 {dimension_numbers = #tpu.dot_dimension_numbers<[1], [0], [0], [1], [0, 0, 1, 1], [], []>} : vector<8x16xbf16>, vector<16x8xbf16>, vector<8x8xf32> -> vector<8x8xf32>
    %c0_9 = arith.constant 0 : index
    %c0_10 = arith.constant 0 : index
    %c0_11 = arith.constant 0 : index
    %c0_12 = arith.constant 0 : index
    %11 = vector.load %arg5[%c0_9, %c0_10, %c0_11, %c0_12] : memref<1x3x8x8xf32, #tpu.memory_space<vmem>>, vector<1x1x8x8xf32>
    %12 = vector.shape_cast %11 : vector<1x1x8x8xf32> to vector<8x8xf32>
    %13 = vector.broadcast %1 : f32 to vector<8x8xf32>
    %14 = arith.mulf %13, %12 : vector<8x8xf32>
    %15 = arith.addf %10, %14 : vector<8x8xf32>
    %c0_13 = arith.constant 0 : index
    %c0_14 = arith.constant 0 : index
    %c0_15 = arith.constant 0 : index
    %c0_16 = arith.constant 0 : index
    %16 = vector.load %arg6[%c0_13, %c0_14, %c0_15, %c0_16] : memref<1x3x8x8xf32, #tpu.memory_space<vmem>>, vector<1x1x8x8xf32>
    %17 = vector.shape_cast %16 : vector<1x1x8x8xf32> to vector<8x8xf32>
    %18 = vector.shape_cast %15 : vector<8x8xf32> to vector<1x1x8x8xf32>
    tpu.vector_store %arg6[%c0_13, %c0_14, %c0_15, %c0_16], %18 {strides = array<i32>} : memref<1x3x8x8xf32, #tpu.memory_space<vmem>>, vector<1x1x8x8xf32>,
    %c1 = arith.constant 1 : index
    %c0_17 = arith.constant 0 : index
    %c0_18 = arith.constant 0 : index
    %19 = vector.load %arg3[%c1, %c0_17, %c0_18] : memref<3x16x16xbf16, #tpu.memory_space<vmem>>, vector<1x16x16xbf16>
    %20 = vector.shape_cast %19 : vector<1x16x16xbf16> to vector<16x16xbf16>
    %cst_19 = arith.constant dense<0.000000e+00> : vector<8x16xf32>
    %21 = tpu.matmul %3, %20, %cst_19 {dimension_numbers = #tpu.dot_dimension_numbers<[1], [0], [0], [1], [0, 0, 1, 1], [], []>} : vector<8x16xbf16>, vector<16x16xbf16>, vector<8x16xf32> -> vector<8x16xf32>
    %22 = arith.truncf %21 : vector<8x16xf32> to vector<8x16xbf16>
    %cst_20 = arith.constant dense<0.000000e+00> : vector<8x8xf32>
    %23 = tpu.matmul %22, %5, %cst_20 {dimension_numbers = #tpu.dot_dimension_numbers<[1], [0], [0], [1], [0, 0, 1, 1], [], []>} : vector<8x16xbf16>, vector<16x8xbf16>, vector<8x8xf32> -> vector<8x8xf32>
    %c0_21 = arith.constant 0 : index
    %c1_22 = arith.constant 1 : index
    %c0_23 = arith.constant 0 : index
    %c0_24 = arith.constant 0 : index
    %24 = vector.load %arg5[%c0_21, %c1_22, %c0_23, %c0_24] : memref<1x3x8x8xf32, #tpu.memory_space<vmem>>, vector<1x1x8x8xf32>
    %25 = vector.shape_cast %24 : vector<1x1x8x8xf32> to vector<8x8xf32>
    %26 = vector.broadcast %1 : f32 to vector<8x8xf32>
    %27 = arith.mulf %26, %25 : vector<8x8xf32>
    %28 = arith.addf %23, %27 : vector<8x8xf32>
    %c0_25 = arith.constant 0 : index
    %c1_26 = arith.constant 1 : index
    %c0_27 = arith.constant 0 : index
    %c0_28 = arith.constant 0 : index
    %29 = vector.load %arg6[%c0_25, %c1_26, %c0_27, %c0_28] : memref<1x3x8x8xf32, #tpu.memory_space<vmem>>, vector<1x1x8x8xf32>
    %30 = vector.shape_cast %29 : vector<1x1x8x8xf32> to vector<8x8xf32>
    %31 = vector.shape_cast %28 : vector<8x8xf32> to vector<1x1x8x8xf32>
    tpu.vector_store %arg6[%c0_25, %c1_26, %c0_27, %c0_28], %31 {strides = array<i32>} : memref<1x3x8x8xf32, #tpu.memory_space<vmem>>, vector<1x1x8x8xf32>,
    %c2 = arith.constant 2 : index
    %c0_29 = arith.constant 0 : index
    %c0_30 = arith.constant 0 : index
    %32 = vector.load %arg3[%c2, %c0_29, %c0_30] : memref<3x16x16xbf16, #tpu.memory_space<vmem>>, vector<1x16x16xbf16>
    %33 = vector.shape_cast %32 : vector<1x16x16xbf16> to vector<16x16xbf16>
    %cst_31 = arith.constant dense<0.000000e+00> : vector<8x16xf32>
    %34 = tpu.matmul %3, %33, %cst_31 {dimension_numbers = #tpu.dot_dimension_numbers<[1], [0], [0], [1], [0, 0, 1, 1], [], []>} : vector<8x16xbf16>, vector<16x16xbf16>, vector<8x16xf32> -> vector<8x16xf32>
    %35 = arith.truncf %34 : vector<8x16xf32> to vector<8x16xbf16>
    %cst_32 = arith.constant dense<0.000000e+00> : vector<8x8xf32>
    %36 = tpu.matmul %35, %5, %cst_32 {dimension_numbers = #tpu.dot_dimension_numbers<[1], [0], [0], [1], [0, 0, 1, 1], [], []>} : vector<8x16xbf16>, vector<16x8xbf16>, vector<8x8xf32> -> vector<8x8xf32>
    %c0_33 = arith.constant 0 : index
    %c2_34 = arith.constant 2 : index
    %c0_35 = arith.constant 0 : index
    %c0_36 = arith.constant 0 : index
    %37 = vector.load %arg5[%c0_33, %c2_34, %c0_35, %c0_36] : memref<1x3x8x8xf32, #tpu.memory_space<vmem>>, vector<1x1x8x8xf32>
    %38 = vector.shape_cast %37 : vector<1x1x8x8xf32> to vector<8x8xf32>
    %39 = vector.broadcast %1 : f32 to vector<8x8xf32>
    %40 = arith.mulf %39, %38 : vector<8x8xf32>
    %41 = arith.addf %36, %40 : vector<8x8xf32>
    %c0_37 = arith.constant 0 : index
    %c2_38 = arith.constant 2 : index
    %c0_39 = arith.constant 0 : index
    %c0_40 = arith.constant 0 : index
    %42 = vector.load %arg6[%c0_37, %c2_38, %c0_39, %c0_40] : memref<1x3x8x8xf32, #tpu.memory_space<vmem>>, vector<1x1x8x8xf32>
    %43 = vector.shape_cast %42 : vector<1x1x8x8xf32> to vector<8x8xf32>
    %44 = vector.shape_cast %41 : vector<8x8xf32> to vector<1x1x8x8xf32>
    tpu.vector_store %arg6[%c0_37, %c2_38, %c0_39, %c0_40], %44 {strides = array<i32>} : memref<1x3x8x8xf32, #tpu.memory_space<vmem>>, vector<1x1x8x8xf32>,
    return
  }
  func.func @transform_0(%arg0: i32, %arg1: memref<5xf32, #tpu.memory_space<smem>>) -> (i32, i32, i32) {
    %c0_i32 = arith.constant 0 : i32
    %c0_i32_0 = arith.constant 0 : i32
    %c0_i32_1 = arith.constant 0 : i32
    return %arg0, %c0_i32, %c0_i32_0 : i32, i32, i32
  }
  func.func @transform_1(%arg0: i32, %arg1: memref<5xf32, #tpu.memory_space<smem>>) -> (i32, i32, i32) {
    %c0_i32 = arith.constant 0 : i32
    %c0_i32_0 = arith.constant 0 : i32
    %c0_i32_1 = arith.constant 0 : i32
    %c0_i32_2 = arith.constant 0 : i32
    return %c0_i32, %c0_i32_0, %c0_i32_1 : i32, i32, i32
  }
  func.func @transform_2(%arg0: i32, %arg1: memref<5xf32, #tpu.memory_space<smem>>) -> (i32, i32, i32) {
    %c0_i32 = arith.constant 0 : i32
    %c0_i32_0 = arith.constant 0 : i32
    %c0_i32_1 = arith.constant 0 : i32
    return %arg0, %c0_i32, %c0_i32_0 : i32, i32, i32
  }
  func.func @transform_3(%arg0: i32, %arg1: memref<5xf32, #tpu.memory_space<smem>>) -> (i32, i32, i32, i32) {
    %c0_i32 = arith.constant 0 : i32
    %c0_i32_0 = arith.constant 0 : i32
    %c0_i32_1 = arith.constant 0 : i32
    %c0_i32_2 = arith.constant 0 : i32
    return %arg0, %c0_i32, %c0_i32_0, %c0_i32_1 : i32, i32, i32, i32
  }
  func.func @transform_4(%arg0: i32, %arg1: memref<5xf32, #tpu.memory_space<smem>>) -> (i32, i32, i32, i32) {
    %c0_i32 = arith.constant 0 : i32
    %c0_i32_0 = arith.constant 0 : i32
    %c0_i32_1 = arith.constant 0 : i32
    %c0_i32_2 = arith.constant 0 : i32
    return %arg0, %c0_i32, %c0_i32_0, %c0_i32_1 : i32, i32, i32, i32
  }
}

</mosaic_0001>

<llo_original>
// kernel: tpu_custom_call.1
$region0: #{tpu_custom_call.1}
  #allocation0 [shape = 'u32[]', space=smem, size = 0x4, offset = 0x4, fixed_abs, tag = 'smem constant byte address 0x4 - core index']
  #allocation1 [shape = 'u32[72,128]{1,0:T(1,128)}', space=vmem, size = 0x9000, scoped, tag = 'internal scratch']
  #allocation2 [shape = 's32[1]{0}', space=sflag, size = 0x4, scoped, tag = 'scoped memory for tpu_custom_call.1']
  #allocation3 [shape = 'u8[512]{0}', space=smem, size = 0x200, scoped, tag = 'prefetched SMEM operand 0']
  %s0 = inlined_call_operand.vmem [shape: f32[5], index: 0, kind: input, shape index: {}]
  %s1 = inlined_call_operand.vmem [shape: bf16[5,8,16], index: 1, kind: input, shape index: {}]
  %s2 = inlined_call_operand.vmem [shape: bf16[3,16,16], index: 2, kind: input, shape index: {}]
  %s3 = inlined_call_operand.vmem [shape: bf16[5,16,8], index: 3, kind: input, shape index: {}]
  %s4 = inlined_call_operand.hbm [shape: f32[5,3,8,8], index: 4, kind: input, shape index: {}]
  %s5 = inlined_call_operand.hbm [shape: f32[5,3,8,8], index: 5, kind: output, shape index: {}]
  %s6 = sld [smem:[#allocation0]]
  $region53: #{tpu_custom_call.1} parent=0
    _
  %s8 = ssub.s32 1, %s6
  %s9 = scalar_select 0, %s8, %s6
  %s11 = sshll.u32 %s0, 4
  %s12 = int_to_ptr.vmem [resolvable:$true] %s11
  %14 = dma.vmem_to_smem %s12, 16, [#allocation3], [#allocation2]
  %16 = dma.done [#allocation2], 16
  %17 = sfence
  $region1: #{tpu_custom_call.1} parent=0
    #allocation4 [shape = 'u8[24576]{0}', space=vmem, size = 0x6000, scoped, tag = 'input window, operand 4']
    #allocation5 [shape = 's32[2]{0}', space=sflag, size = 0x8, scoped, tag = 'scoped memory for tpu_custom_call.1']
    #allocation6 [shape = 's32[2]{0}', space=sflag, size = 0x8, scoped, tag = 'scoped memory for tpu_custom_call.1']
    #allocation7 [shape = 'u8[24576]{0}', space=vmem, size = 0x6000, scoped, tag = 'output window, operand 0']
    %18 = vsyncpa [#allocation5], 0
    %s19 = scalar_lea.sflag [#allocation5], 1
    %20 = vsyncpa %s19, 0
    %21 = vsyncpa [#allocation6], 0
    %s22 = scalar_lea.sflag [#allocation6], 1
    %23 = vsyncpa %s22, 0
    loop: start=0, step=1, limit=7
    $region2: #{tpu_custom_call.1} parent=1 // loop_pre_header
      _
    $region3: #{tpu_custom_call.1} parent=1 // loop_header
      %s25 = sphi 0, %s29
      %p26 = scmp.ge.s32.totalorder %s25, 7
      %s35 = sphi 0, %s37
      %s38 = sphi 0, %s35
      %s39 = sphi 0, %s38
      %s55 = sphi 0, %s39
      %s59 = sphi 0, %s59
      %s61 = sphi 0, %s59
      %s62 = sphi 0, %s61
      %s76 = sphi 0, %s62
      %s82 = sphi 0, %s84
      %s85 = sphi 0, %s82
      %s86 = sphi 0, %s85
      %s102 = sphi 0, %s86
      %s108 = sphi 0, %s110
      %s111 = sphi 0, %s108
      %s112 = sphi 0, %s111
      %s128 = sphi 0, %s112
      %s134 = sphi 0, %s136
      %s137 = sphi 0, %s134
      %s138 = sphi 0, %s137
      %s154 = sphi 0, %s138
    $region4: #{tpu_custom_call.1} parent=1 // loop_header_branch
      %28 = sbr.rel (%p26) target = $region8
    $region5: #{tpu_custom_call.1} parent=1 // loop_body
      %s30 = ssub.s32 %s25, 1
      %s31 = ssub.s32 %s25, 2
      %s32 = sadd.s32 %s25, 1
      %s33 = ssub.s32 %s25, %s32
      %p34 = scmp.eq.s32.totalorder %s33, 0
      %s36 = sadd.s32 %s35, 1
      %s37 = scalar_select %p34, %s35, %s36
      %p40 = pneg %p34
      %p41 = scmp.eq.s32.totalorder %s25, 4
      %p42 = por %p40, %p41
      %p43 = scmp.ne.s32.totalorder %s35, %s38
      %p44 = scmp.eq.s32.totalorder %s25, 0
      %p45 = por %p43, %p44
      %p46 = scmp.ne.s32.totalorder %s35, %s38
      %p47 = scmp.eq.s32.totalorder %s30, 4
      %p48 = por %p46, %p47
      %p49 = scmp.ne.s32.totalorder %s38, %s39
      %p50 = scmp.eq.s32.totalorder %s30, 0
      %p51 = por %p49, %p50
      %p52 = scmp.ne.s32.totalorder %s38, %s39
      %p53 = scmp.eq.s32.totalorder %s31, 4
      %p54 = por %p52, %p53
      %p56 = scmp.ne.s32.totalorder %s39, %s55
      %p57 = scmp.eq.s32.totalorder %s31, 0
      %p58 = por %p56, %p57
      %s60 = sadd.s32 %s59, 1
      %p63 = scmp.eq.s32.totalorder %s25, 4
      %p64 = scmp.ne.s32.totalorder %s59, %s61
      %p65 = scmp.eq.s32.totalorder %s25, 0
      %p66 = por %p64, %p65
      %p67 = scmp.ne.s32.totalorder %s59, %s61
      %p68 = scmp.eq.s32.totalorder %s30, 4
      %p69 = por %p67, %p68
      %p70 = scmp.ne.s32.totalorder %s61, %s62
      %p71 = scmp.eq.s32.totalorder %s30, 0
      %p72 = por %p70, %p71
      %p73 = scmp.ne.s32.totalorder %s61, %s62
      %p74 = scmp.eq.s32.totalorder %s31, 4
      %p75 = por %p73, %p74
      %p77 = scmp.ne.s32.totalorder %s62, %s76
      %p78 = scmp.eq.s32.totalorder %s31, 0
      %p79 = por %p77, %p78
      %s80 = ssub.s32 %s25, %s32
      %p81 = scmp.eq.s32.totalorder %s80, 0
      %s83 = sadd.s32 %s82, 1
      %s84 = scalar_select %p81, %s82, %s83
      %p87 = pneg %p81
      %p88 = scmp.eq.s32.totalorder %s25, 4
      %p89 = por %p87, %p88
      %p90 = scmp.ne.s32.totalorder %s82, %s85
      %p91 = scmp.eq.s32.totalorder %s25, 0
      %p92 = por %p90, %p91
      %p93 = scmp.ne.s32.totalorder %s82, %s85
      %p94 = scmp.eq.s32.totalorder %s30, 4
      %p95 = por %p93, %p94
      %p96 = scmp.ne.s32.totalorder %s85, %s86
      %p97 = scmp.eq.s32.totalorder %s30, 0
      %p98 = por %p96, %p97
      %p99 = scmp.ne.s32.totalorder %s85, %s86
      %p100 = scmp.eq.s32.totalorder %s31, 4
      %p101 = por %p99, %p100
      %p103 = scmp.ne.s32.totalorder %s86, %s102
      %p104 = scmp.eq.s32.totalorder %s31, 0
      %p105 = por %p103, %p104
      %s106 = ssub.s32 %s25, %s32
      %p107 = scmp.eq.s32.totalorder %s106, 0
      %s109 = sadd.s32 %s108, 1
      %s110 = scalar_select %p107, %s108, %s109
      %p113 = pneg %p107
      %p114 = scmp.eq.s32.totalorder %s25, 4
      %p115 = por %p113, %p114
      %p116 = scmp.ne.s32.totalorder %s108, %s111
      %p117 = scmp.eq.s32.totalorder %s25, 0
      %p118 = por %p116, %p117
      %p119 = scmp.ne.s32.totalorder %s108, %s111
      %p120 = scmp.eq.s32.totalorder %s30, 4
      %p121 = por %p119, %p120
      %p122 = scmp.ne.s32.totalorder %s111, %s112
      %p123 = scmp.eq.s32.totalorder %s30, 0
      %p124 = por %p122, %p123
      %p125 = scmp.ne.s32.totalorder %s111, %s112
      %p126 = scmp.eq.s32.totalorder %s31, 4
      %p127 = por %p125, %p126
      %p129 = scmp.ne.s32.totalorder %s112, %s128
      %p130 = scmp.eq.s32.totalorder %s31, 0
      %p131 = por %p129, %p130
      %s132 = ssub.s32 %s25, %s32
      %p133 = scmp.eq.s32.totalorder %s132, 0
      %s135 = sadd.s32 %s134, 1
      %s136 = scalar_select %p133, %s134, %s135
      %p139 = pneg %p133
      %p140 = scmp.eq.s32.totalorder %s25, 4
      %p141 = por %p139, %p140
      %p142 = scmp.ne.s32.totalorder %s134, %s137
      %p143 = scmp.eq.s32.totalorder %s25, 0
      %p144 = por %p142, %p143
      %p145 = scmp.ne.s32.totalorder %s134, %s137
      %p146 = scmp.eq.s32.totalorder %s30, 4
      %p147 = por %p145, %p146
      %p148 = scmp.ne.s32.totalorder %s137, %s138
      %p149 = scmp.eq.s32.totalorder %s30, 0
      %p150 = por %p148, %p149
      %p151 = scmp.ne.s32.totalorder %s137, %s138
      %p152 = scmp.eq.s32.totalorder %s31, 4
      %p153 = por %p151, %p152
      %p155 = scmp.ne.s32.totalorder %s138, %s154
      %p156 = scmp.eq.s32.totalorder %s31, 0
      %p157 = por %p155, %p156
      %p158 = scmp.le.s32.totalorder 1, %s25
      %p159 = scmp.lt.s32.totalorder %s25, 6
      %p160 = pnand %p158, %p159
      %p161 = pneg %p160
      // Predicated region
      $region9: #{tpu_custom_call.1} parent=5 // pred_check
        _
      $region10: #{tpu_custom_call.1} parent=5 // pred_check_branch
        %163 = sbr.rel (%p160) target = $region12
      $region11: #{tpu_custom_call.1} parent=5 // pred_region
        %s164 = ssub.s32 %s25, 1
        // Predicated region
        $region13: #{tpu_custom_call.1} parent=11 // pred_check
          %p165 = pneg %p72
        $region14: #{tpu_custom_call.1} parent=11 // pred_check_branch
          %167 = sbr.rel (%p165) target = $region16
        $region15: #{tpu_custom_call.1} parent=11 // pred_region
          _
        $region16: #{tpu_custom_call.1} parent=11 // pred_fallthru
          _
      $region12: #{tpu_custom_call.1} parent=5 // pred_fallthru
        _
      %p168 = scmp.lt.s32.totalorder %s25, 5
      // Predicated region
      $region17: #{tpu_custom_call.1} parent=5 // pred_check
        %p169 = pneg %p168
      $region18: #{tpu_custom_call.1} parent=5 // pred_check_branch
        %171 = sbr.rel (%p169) target = $region20
      $region19: #{tpu_custom_call.1} parent=5 // pred_region
        // Predicated region
        $region21: #{tpu_custom_call.1} parent=19 // pred_check
          %p172 = pneg %p45
        $region22: #{tpu_custom_call.1} parent=19 // pred_check_branch
          %174 = sbr.rel (%p172) target = $region24
        $region23: #{tpu_custom_call.1} parent=19 // pred_region
          %p175 = scmp.lt.s32.totalorder %s25, 4
          %s176 = scalar_select %p175, %s25, 4
          %s177 = smul.addr %s176, 4
          %s178 = scalar_lea.vmem %s1, %s177
        $region24: #{tpu_custom_call.1} parent=19 // pred_fallthru
          _
        // Predicated region
        $region25: #{tpu_custom_call.1} parent=19 // pred_check
          %p179 = pneg %p92
        $region26: #{tpu_custom_call.1} parent=19 // pred_check_branch
          %181 = sbr.rel (%p179) target = $region28
        $region27: #{tpu_custom_call.1} parent=19 // pred_region
          %p182 = scmp.lt.s32.totalorder %s25, 4
          %s183 = scalar_select %p182, %s25, 4
          %s184 = smul.addr %s183, 2
          %s185 = smul.addr %s184, 4
          %s186 = scalar_lea.vmem %s3, %s185
        $region28: #{tpu_custom_call.1} parent=19 // pred_fallthru
          _
        // Predicated region
        $region29: #{tpu_custom_call.1} parent=19 // pred_check
          %p187 = pneg %p118
        $region30: #{tpu_custom_call.1} parent=19 // pred_check_branch
          %189 = sbr.rel (%p187) target = $region32
        $region31: #{tpu_custom_call.1} parent=19 // pred_region
          %s190 = sand.u32 %s108, 1
          %s191 = scalar_lea.sflag [#allocation5], %s190
          %s192 = sand.u32 %s108, 1
          %s193 = smul.addr %s192, 24
          %s194 = scalar_lea.vmem [#allocation4], %s193
          %196 = vsyncadd %s191, 0
          %s197 = smul.addr %s25, 3
          %s198 = smul.addr %s197, 8
          %s199 = scalar_lea.hbm %s4, %s198
          %s200 = sshll.u32 %s199, 4
          %s201 = int_to_ptr.hbm [resolvable:$true] %s200
          %s202 = sshll.u32 %s194, 4
          %s203 = int_to_ptr.vmem [resolvable:$true] %s202
          %208 = dma.hbm_to_vmem [thread:$0]  %s201, 384, %s203, %s191, 128, 128, 8
        $region32: #{tpu_custom_call.1} parent=19 // pred_fallthru
          _
      $region20: #{tpu_custom_call.1} parent=5 // pred_fallthru
        _
      %p209 = scmp.le.s32.totalorder 1, %s25
      %p210 = scmp.lt.s32.totalorder %s25, 6
      %p211 = pnand %p209, %p210
      %p212 = pneg %p211
      // Predicated region
      $region33: #{tpu_custom_call.1} parent=5 // pred_check
        _
      $region34: #{tpu_custom_call.1} parent=5 // pred_check_branch
        %214 = sbr.rel (%p211) target = $region36
      $region35: #{tpu_custom_call.1} parent=5 // pred_region
        %s215 = ssub.s32 %s25, 1
        %s216 = sand.u32 %s111, 1
        %s217 = scalar_lea.sflag [#allocation5], %s216
        %s218 = sand.u32 %s111, 1
        %s219 = smul.addr %s218, 24
        %s220 = scalar_lea.vmem [#allocation4], %s219
        // Predicated region
        $region37: #{tpu_custom_call.1} parent=35 // pred_check
          %p221 = pneg %p124
        $region38: #{tpu_custom_call.1} parent=35 // pred_check_branch
          %223 = sbr.rel (%p221) target = $region40
        $region39: #{tpu_custom_call.1} parent=35 // pred_region
          %225 = dma.done %s217, 384
        $region40: #{tpu_custom_call.1} parent=35 // pred_fallthru
          _
        %p226 = scmp.lt.s32.totalorder %s30, 4
        %s227 = scalar_select %p226, %s30, 4
        %s228 = smul.addr %s227, 4
        %s229 = scalar_lea.vmem %s1, %s228
        %p230 = pneg %p51
        %p231 = pneg %p48
        %p232 = pneg %p72
        %p233 = pneg %p69
        %p234 = scmp.lt.s32.totalorder %s30, 4
        %s235 = scalar_select %p234, %s30, 4
        %s236 = smul.addr %s235, 2
        %s237 = smul.addr %s236, 4
        %s238 = scalar_lea.vmem %s3, %s237
        %p239 = pneg %p98
        %p240 = pneg %p95
        %s241 = sand.u32 %s111, 1
        %s242 = scalar_lea.sflag [#allocation5], %s241
        %s243 = sand.u32 %s111, 1
        %s244 = smul.addr %s243, 24
        %s245 = scalar_lea.vmem [#allocation4], %s244
        %p246 = pneg %p124
        %p247 = pneg %p121
        %p248 = pneg %p150
        %p249 = pneg %p147
        %s250 = sand.u32 %s137, 1
        %s251 = scalar_lea.sflag [#allocation6], %s250
        %s252 = sand.u32 %s137, 1
        %s253 = smul.addr %s252, 24
        %s254 = scalar_lea.vmem [#allocation7], %s253
        %p255 = scmp.lt.s32.totalorder %s30, 4
        %s256 = scalar_select %p255, %s30, 4
        %s257 = smul.addr %s256, 4
        %s258 = scalar_lea.vmem %s1, %s257
        %p259 = scmp.lt.s32.totalorder %s30, 4
        %s260 = scalar_select %p259, %s30, 4
        %s261 = smul.addr %s260, 2
        %s262 = smul.addr %s261, 4
        %s263 = scalar_lea.vmem %s3, %s262
        %s265 = sld [smem:[#allocation3 + %s30]]
        %v266 = vld [vmem:[%s258] sm:$0xf]
        %v267 = vld [vmem:[%s263] sm:$0xf]
        %v268 = vld [vmem:[%s263 + $0x4] sm:$0xf]
        %v269 = vld [vmem:[%s2] sm:$0xf]
        %v270 = vld [vmem:[%s2 + $0x4] sm:$0xf]
        %v273 = vunpack.c.l.b16 %v269
        %v274 = vunpack.c.l.b16 %v270
        %v275 = vpack.c.b16 %v274, %v273
        %vm277 = vcmask 130048
        %v279 = vsel %vm277, %v266, 0
        %281 = vmatpush.bf16.msra.mxu0 0
        %282 = vmatpush.bf16.msra.mxu0 0
        %283 = vmatpush.bf16.msra.mxu0 0
        %284 = vmatpush.bf16.msra.mxu0 0
        %285 = vmatpush.bf16.msra.mxu0 0
        %286 = vmatpush.bf16.msra.mxu0 0
        %287 = vmatpush.bf16.msra.mxu0 0
        %288 = vmatpush.bf16.msra.mxu0 %v275
        %289 = vmatmul.bf16.gmra.mxu0 %v279
        %v290 = vpop.f32.mrf.mxu0
        %v291 = vadd.f32 0.0, %v290
        %v292 = vpop.f32.mrf.mxu0
        %293 = vdwg.mxu0
        %v294 = vpack.c.bf16 %v291, %v291
        %v295 = vld [vmem:[%s220] sm:$0xff]
        %v296 = vstv %s265
        %v297 = vmul.f32 %v296, %v295
        %v300 = vunpack.c.l.b16 %v267
        %v301 = vunpack.c.l.b16 %v268
        %v302 = vpack.c.b16 %v301, %v300
        %v305 = vsel %vm277, %v294, 0
        %307 = vmatpush.bf16.msra.mxu0 0
        %308 = vmatpush.bf16.msra.mxu0 0
        %309 = vmatpush.bf16.msra.mxu0 0
        %310 = vmatpush.bf16.msra.mxu0 0
        %311 = vmatpush.bf16.msra.mxu0 0
        %312 = vmatpush.bf16.msra.mxu0 0
        %313 = vmatpush.bf16.msra.mxu0 0
        %314 = vmatpush.bf16.msra.mxu0 %v302
        %315 = vmatmul.bf16.gmra.mxu0 %v305
        %v316 = vpop.f32.mrf.mxu0
        %v317 = vadd.f32 %v297, %v316
        %v318 = vpop.f32.mrf.mxu0
        %319 = vdwg.mxu0
        %vm320 = vcmask 64512
        %321 = vst.msk [vmem:[%s254] sm:$0xff] %vm320, %v317
        %s322 = scalar_lea.vmem %s2, 8
        %v323 = vld [vmem:[%s322] sm:$0xf]
        %v324 = vld [vmem:[%s322 + $0x4] sm:$0xf]
        %v327 = vunpack.c.l.b16 %v323
        %v328 = vunpack.c.l.b16 %v324
        %v329 = vpack.c.b16 %v328, %v327
        %331 = vmatpush.bf16.msra.mxu0 0
        %332 = vmatpush.bf16.msra.mxu0 0
        %333 = vmatpush.bf16.msra.mxu0 0
        %334 = vmatpush.bf16.msra.mxu0 0
        %335 = vmatpush.bf16.msra.mxu0 0
        %336 = vmatpush.bf16.msra.mxu0 0
        %337 = vmatpush.bf16.msra.mxu0 0
        %338 = vmatpush.bf16.msra.mxu0 %v329
        %339 = vmatmul.bf16.gmra.mxu0 %v279
        %v340 = vpop.f32.mrf.mxu0
        %v341 = vadd.f32 0.0, %v340
        %v342 = vpop.f32.mrf.mxu0
        %343 = vdwg.mxu0
        %v344 = vpack.c.bf16 %v341, %v341
        %s345 = scalar_lea.vmem %s220, 8 [#allocation4]
        %v346 = vld [vmem:[%s345] sm:$0xff]
        %v347 = vmul.f32 %v296, %v346
        %v349 = vsel %vm277, %v344, 0
        %351 = vmatpush.bf16.msra.mxu0 0
        %352 = vmatpush.bf16.msra.mxu0 0
        %353 = vmatpush.bf16.msra.mxu0 0
        %354 = vmatpush.bf16.msra.mxu0 0
        %355 = vmatpush.bf16.msra.mxu0 0
        %356 = vmatpush.bf16.msra.mxu0 0
        %357 = vmatpush.bf16.msra.mxu0 0
        %358 = vmatpush.bf16.msra.mxu0 %v302
        %359 = vmatmul.bf16.gmra.mxu0 %v349
        %v360 = vpop.f32.mrf.mxu0
        %v361 = vadd.f32 %v347, %v360
        %v362 = vpop.f32.mrf.mxu0
        %363 = vdwg.mxu0
        %s364 = scalar_lea.vmem %s254, 8 [#allocation7]
        %365 = vst.msk [vmem:[%s364] sm:$0xff] %vm320, %v361
        %s366 = scalar_lea.vmem %s2, 16
        %v367 = vld [vmem:[%s366] sm:$0xf]
        %v368 = vld [vmem:[%s366 + $0x4] sm:$0xf]
        %v371 = vunpack.c.l.b16 %v367
        %v372 = vunpack.c.l.b16 %v368
        %v373 = vpack.c.b16 %v372, %v371
        %375 = vmatpush.bf16.msra.mxu0 0
        %376 = vmatpush.bf16.msra.mxu0 0
        %377 = vmatpush.bf16.msra.mxu0 0
        %378 = vmatpush.bf16.msra.mxu0 0
        %379 = vmatpush.bf16.msra.mxu0 0
        %380 = vmatpush.bf16.msra.mxu0 0
        %381 = vmatpush.bf16.msra.mxu0 0
        %382 = vmatpush.bf16.msra.mxu0 %v373
        %383 = vmatmul.bf16.gmra.mxu0 %v279
        %v384 = vpop.f32.mrf.mxu0
        %v385 = vadd.f32 0.0, %v384
        %v386 = vpop.f32.mrf.mxu0
        %387 = vdwg.mxu0
        %v388 = vpack.c.bf16 %v385, %v385
        %s389 = scalar_lea.vmem %s220, 16 [#allocation4]
        %v390 = vld [vmem:[%s389] sm:$0xff]
        %v391 = vmul.f32 %v296, %v390
        %v393 = vsel %vm277, %v388, 0
        %395 = vmatpush.bf16.msra.mxu0 0
        %396 = vmatpush.bf16.msra.mxu0 0
        %397 = vmatpush.bf16.msra.mxu0 0
        %398 = vmatpush.bf16.msra.mxu0 0
        %399 = vmatpush.bf16.msra.mxu0 0
        %400 = vmatpush.bf16.msra.mxu0 0
        %401 = vmatpush.bf16.msra.mxu0 0
        %402 = vmatpush.bf16.msra.mxu0 %v302
        %403 = vmatmul.bf16.gmra.mxu0 %v393
        %v404 = vpop.f32.mrf.mxu0
        %v405 = vadd.f32 %v391, %v404
        %v406 = vpop.f32.mrf.mxu0
        %407 = vdwg.mxu0
        %s408 = scalar_lea.vmem %s254, 16 [#allocation7]
        %409 = vst.msk [vmem:[%s408] sm:$0xff] %vm320, %v405
        %s410 = sand.u32 %s137, 1
        %s411 = scalar_lea.sflag [#allocation6], %s410
        %s412 = sand.u32 %s137, 1
        %s413 = smul.addr %s412, 24
        %s414 = scalar_lea.vmem [#allocation7], %s413
        // Predicated region
        $region41: #{tpu_custom_call.1} parent=35 // pred_check
          %p415 = pneg %p147
        $region42: #{tpu_custom_call.1} parent=35 // pred_check_branch
          %417 = sbr.rel (%p415) target = $region44
        $region43: #{tpu_custom_call.1} parent=35 // pred_region
          %419 = vsyncadd %s411, 0
          %s420 = smul.addr %s30, 3
          %s421 = smul.addr %s420, 8
          %s422 = scalar_lea.hbm %s5, %s421
          %s423 = sshll.u32 %s414, 4
          %s424 = int_to_ptr.vmem [resolvable:$true] %s423
          %s425 = sshll.u32 %s422, 4
          %s426 = int_to_ptr.hbm [resolvable:$true] %s425
          %431 = dma.vmem_to_hbm [thread:$0]  %s424, 384, %s426, %s411, 128, 128, 8
        $region44: #{tpu_custom_call.1} parent=35 // pred_fallthru
          _
      $region36: #{tpu_custom_call.1} parent=5 // pred_fallthru
        _
      %p432 = scmp.le.s32.totalorder 2, %s25
      // Predicated region
      $region45: #{tpu_custom_call.1} parent=5 // pred_check
        %p433 = pneg %p432
      $region46: #{tpu_custom_call.1} parent=5 // pred_check_branch
        %435 = sbr.rel (%p433) target = $region48
      $region47: #{tpu_custom_call.1} parent=5 // pred_region
        %s436 = ssub.s32 %s25, 2
        // Predicated region
        $region49: #{tpu_custom_call.1} parent=47 // pred_check
          %p437 = pneg %p153
        $region50: #{tpu_custom_call.1} parent=47 // pred_check_branch
          %439 = sbr.rel (%p437) target = $region52
        $region51: #{tpu_custom_call.1} parent=47 // pred_region
          %s440 = sand.u32 %s138, 1
          %s441 = scalar_lea.sflag [#allocation6], %s440
          %s442 = sand.u32 %s138, 1
          %s443 = smul.addr %s442, 24
          %s444 = scalar_lea.vmem [#allocation7], %s443
          %446 = dma.done %s441, 384
        $region52: #{tpu_custom_call.1} parent=47 // pred_fallthru
          _
      $region48: #{tpu_custom_call.1} parent=5 // pred_fallthru
        _
    $region6: #{tpu_custom_call.1} parent=1 // loop_footer
      %s29 = sadd.s32 1, %s25
    $region7: #{tpu_custom_call.1} parent=1 // loop_footer_branch
      %24 = sbr.rel target = $region3
    $region8: #{tpu_custom_call.1} parent=1 // loop_exit
      _
    %447 = vsyncpa [#allocation5], 1
    %s448 = scalar_lea.sflag [#allocation5], 1
    %449 = vsyncpa %s448, 1
    %450 = vsyncpa [#allocation6], 1
    %s451 = scalar_lea.sflag [#allocation6], 1
    %452 = vsyncpa %s451, 1

</llo_original>
